<compile_context>
chip_gen: v7x
topology: tpu7x:2x2x1
jax: 0.10.0
libtpu: 0.0.40
codegen_flags: <defaults>
</compile_context>

<pallas_src>
import jax
import jax.numpy as jnp
from jax.experimental import pallas as pl
from jax.experimental.pallas import tpu as pltpu


def _round_up(v, m):
    return (v + m - 1) // m * m


def _enet_kernel(x_ref, wt_ref, b_ref, o_ref, acc_ref):
    # x_ref:  (tm, tk)   activation tile
    # wt_ref: (tk, tn)   pre-transposed weight tile (F-major, A-minor)
    # b_ref:  (1,  tn)   f32 bias tile
    # o_ref:  (tm, tn)   output tile
    # acc_ref:(tm, tn)   f32 accumulator scratch (lives across the K axis)
    k = pl.program_id(2)

    @pl.when(k == 0)
    def _():
        # Fold the bias into the accumulator init (broadcast over rows).
        acc_ref[...] = jnp.zeros_like(acc_ref) + b_ref[...]

    acc_ref[...] += jnp.dot(
        x_ref[...], wt_ref[...], preferred_element_type=jnp.float32
    )

    @pl.when(k == pl.num_programs(2) - 1)
    def _():
        o_ref[...] = acc_ref[...].astype(o_ref.dtype)


def enet_forward(x, weight, bias, *, compute_dtype=None):
    """Pallas equivalent of Enet.forward.

    x:      (batch, in_features)
    weight: (out_features, in_features)   -- torch.nn.Linear layout
    bias:   (out_features,)
    compute_dtype: optional dtype (e.g. jnp.bfloat16) for the MXU inputs on
                   v6e/v7x; accumulation is always f32.
    returns (batch, out_features) in x.dtype
    """
    B, F = x.shape
    A, F2 = weight.shape
    assert F == F2, "in_features mismatch"
    out_dtype = x.dtype

    # One-time transpose outside the kernel: store weight as (F, A) so the
    # contraction is on the RHS leading dim and the MXU needs no vxpose.
    w_t = weight.T

    if compute_dtype is not None:
        x = x.astype(compute_dtype)
        w_t = w_t.astype(compute_dtype)
    bias_f32 = bias.astype(jnp.float32)

    # Tile sizes: MXU-native 128-multiples, bounded so double-buffered f32
    # tiles stay ~2 MiB (fits v7x 64 MiB VMEM / 32 MiB default scope easily).
    tm = 128 if B >= 128 else _round_up(B, 8)
    tn = 256 if A >= 256 else 128
    tk = 512 if F >= 512 else _round_up(F, 128)

    Bp = _round_up(B, tm)
    Ap = _round_up(A, tn)   # lane-dense output (multiple of 128)
    Fp = _round_up(F, tk)

    xp = x if (Bp == B and Fp == F) else jnp.pad(x, ((0, Bp - B), (0, Fp - F)))
    wtp = (
        w_t
        if (Fp == F and Ap == A)
        else jnp.pad(w_t, ((0, Fp - F), (0, Ap - A)))
    )
    bp = jnp.pad(bias_f32, (0, Ap - A)).reshape(1, Ap)

    grid = (Bp // tm, Ap // tn, Fp // tk)

    out = pl.pallas_call(
        _enet_kernel,
        out_shape=jax.ShapeDtypeStruct((Bp, Ap), out_dtype),
        grid_spec=pltpu.PrefetchScalarGridSpec(
            num_scalar_prefetch=0,
            grid=grid,
            in_specs=[
                pl.BlockSpec((tm, tk), lambda i, j, k: (i, k)),
                pl.BlockSpec((tk, tn), lambda i, j, k: (k, j)),
                pl.BlockSpec((1, tn), lambda i, j, k: (0, j)),
            ],
            out_specs=pl.BlockSpec((tm, tn), lambda i, j, k: (i, j)),
            scratch_shapes=[pltpu.VMEM((tm, tn), jnp.float32)],
        ),
        compiler_params=pltpu.CompilerParams(
            dimension_semantics=("parallel", "parallel", "arbitrary"),
        ),
    )(xp, wtp, bp)

    return out[:B, :A]


def init_enet_params(key, in_features, num_attributes, augmented=False,
                     dtype=jnp.float32):
    """Deterministic init mirroring torch.nn.Linear's default (uniform)."""
    out_features = 2 * num_attributes if augmented else num_attributes
    k_w, k_b = jax.random.split(key)
    bound = 1.0 / (in_features ** 0.5)
    weight = jax.random.uniform(
        k_w, (out_features, in_features), dtype=dtype, minval=-bound, maxval=bound)
    bias = jax.random.uniform(
        k_b, (out_features,), dtype=dtype, minval=-bound, maxval=bound)
    return weight, bias


if __name__ == "__main__":
    key = jax.random.PRNGKey(0)
    k_x, k_p, k_x2, k_p2 = jax.random.split(key, 4)

    # --- small demo (module-default-like sizes) -----------------------------
    # NOTE: at these toy sizes a plain XLA `x @ W.T + b` is faster than any
    # custom call; the Pallas path is meant for large batch/feature counts.
    batch = 8
    in_features = 32
    num_attributes = 16
    augmented = False

    x = jax.random.normal(k_x, (batch, in_features), dtype=jnp.float32)
    weight, bias = init_enet_params(k_p, in_features, num_attributes, augmented)

    y = enet_forward(x, weight, bias)
    y = jax.block_until_ready(y)

    y_ref = x @ weight.T + bias
    assert y.shape == (batch, num_attributes)
    assert jnp.allclose(y, y_ref, atol=1e-5, rtol=1e-5)

    # --- larger multi-tile check (exercises the real grid + accumulator) ----
    B2, F2n, A2 = 256, 1024, 384
    x2 = jax.random.normal(k_x2, (B2, F2n), dtype=jnp.float32)
    w2, b2 = init_enet_params(k_p2, F2n, A2)
    y2 = jax.block_until_ready(enet_forward(x2, w2, b2))
    y2_ref = x2 @ w2.T + b2
    assert y2.shape == (B2, A2)
    assert jnp.allclose(y2, y2_ref, atol=2e-4, rtol=2e-4)

    print("KERNEL_OK")
</pallas_src>

<mosaic_0001>
module attributes {stable_mosaic.version = 11 : i64} {
  func.func @_enet_kernel(%arg0: i32, %arg1: i32, %arg2: i32, %arg3: memref<8x128xf32, #tpu.memory_space<vmem>>, %arg4: memref<128x128xf32, #tpu.memory_space<vmem>>, %arg5: memref<1x128xf32, #tpu.memory_space<vmem>>, %arg6: memref<8x128xf32, #tpu.memory_space<vmem>>, %arg7: memref<8x128xf32, #tpu.memory_space<vmem>>) attributes {dimension_semantics = [#tpu.dimension_semantics<parallel>, #tpu.dimension_semantics<parallel>, #tpu.dimension_semantics<arbitrary>], iteration_bounds = array<i64: 1, 1, 1>, scalar_prefetch = 0 : i64, scratch_operands = 1 : i64, tpu.core_type = #tpu.core_type<tc>, window_params = [{transform_indices = @transform_0, window_bounds = array<i64: 8, 128>}, {transform_indices = @transform_1, window_bounds = array<i64: 128, 128>}, {transform_indices = @transform_2, window_bounds = array<i64: 1, 128>}, {transform_indices = @transform_3, window_bounds = array<i64: 8, 128>}]} {
    %c0_i32 = arith.constant 0 : i32
    %0 = arith.cmpi eq, %arg2, %c0_i32 : i32
    %1 = arith.extui %0 : i1 to i32
    %c0_i32_0 = arith.constant 0 : i32
    %2 = arith.cmpi ne, %1, %c0_i32_0 : i32
    scf.if %2 {
      %cst_10 = arith.constant 0.000000e+00 : f32
      %12 = vector.broadcast %cst_10 : f32 to vector<8x128xf32>
      %c0_11 = arith.constant 0 : index
      %c0_12 = arith.constant 0 : index
      %13 = vector.load %arg5[%c0_11, %c0_12] : memref<1x128xf32, #tpu.memory_space<vmem>>, vector<1x128xf32>
      %14 = vector.broadcast %13 : vector<1x128xf32> to vector<8x128xf32>
      %15 = arith.addf %12, %14 : vector<8x128xf32>
      %c0_13 = arith.constant 0 : index
      %c0_14 = arith.constant 0 : index
      %16 = vector.load %arg7[%c0_13, %c0_14] : memref<8x128xf32, #tpu.memory_space<vmem>>, vector<8x128xf32>
      tpu.vector_store %arg7[%c0_13, %c0_14], %15 {strides = array<i32>} : memref<8x128xf32, #tpu.memory_space<vmem>>, vector<8x128xf32>,
    } else {
    }
    %c0 = arith.constant 0 : index
    %c0_1 = arith.constant 0 : index
    %3 = vector.load %arg7[%c0, %c0_1] : memref<8x128xf32, #tpu.memory_space<vmem>>, vector<8x128xf32>
    %c0_2 = arith.constant 0 : index
    %c0_3 = arith.constant 0 : index
    %4 = vector.load %arg3[%c0_2, %c0_3] : memref<8x128xf32, #tpu.memory_space<vmem>>, vector<8x128xf32>
    %c0_4 = arith.constant 0 : index
    %c0_5 = arith.constant 0 : index
    %5 = vector.load %arg4[%c0_4, %c0_5] : memref<128x128xf32, #tpu.memory_space<vmem>>, vector<128x128xf32>
    %cst = arith.constant dense<0.000000e+00> : vector<8x128xf32>
    %6 = tpu.matmul %4, %5, %cst {dimension_numbers = #tpu.dot_dimension_numbers<[1], [0], [0], [1], [0, 0, 1, 1], [], []>} : vector<8x128xf32>, vector<128x128xf32>, vector<8x128xf32> -> vector<8x128xf32>
    %7 = arith.addf %3, %6 : vector<8x128xf32>
    %c0_6 = arith.constant 0 : index
    %c0_7 = arith.constant 0 : index
    %8 = vector.load %arg7[%c0_6, %c0_7] : memref<8x128xf32, #tpu.memory_space<vmem>>, vector<8x128xf32>
    tpu.vector_store %arg7[%c0_6, %c0_7], %7 {strides = array<i32>} : memref<8x128xf32, #tpu.memory_space<vmem>>, vector<8x128xf32>,
    %c0_i32_8 = arith.constant 0 : i32
    %9 = arith.cmpi eq, %arg2, %c0_i32_8 : i32
    %10 = arith.extui %9 : i1 to i32
    %c0_i32_9 = arith.constant 0 : i32
    %11 = arith.cmpi ne, %10, %c0_i32_9 : i32
    scf.if %11 {
      %c0_10 = arith.constant 0 : index
      %c0_11 = arith.constant 0 : index
      %12 = vector.load %arg7[%c0_10, %c0_11] : memref<8x128xf32, #tpu.memory_space<vmem>>, vector<8x128xf32>
      %c0_12 = arith.constant 0 : index
      %c0_13 = arith.constant 0 : index
      %13 = vector.load %arg6[%c0_12, %c0_13] : memref<8x128xf32, #tpu.memory_space<vmem>>, vector<8x128xf32>
      tpu.vector_store %arg6[%c0_12, %c0_13], %12 {strides = array<i32>} : memref<8x128xf32, #tpu.memory_space<vmem>>, vector<8x128xf32>,
    } else {
    }
    return
  }
  func.func @transform_0(%arg0: i32, %arg1: i32, %arg2: i32) -> (i32, i32) {
    %c0_i32 = arith.constant 0 : i32
    return %arg0, %arg2 : i32, i32
  }
  func.func @transform_1(%arg0: i32, %arg1: i32, %arg2: i32) -> (i32, i32) {
    %c0_i32 = arith.constant 0 : i32
    return %arg2, %arg1 : i32, i32
  }
  func.func @transform_2(%arg0: i32, %arg1: i32, %arg2: i32) -> (i32, i32) {
    %c0_i32 = arith.constant 0 : i32
    %c0_i32_0 = arith.constant 0 : i32
    return %c0_i32, %arg1 : i32, i32
  }
  func.func @transform_3(%arg0: i32, %arg1: i32, %arg2: i32) -> (i32, i32) {
    %c0_i32 = arith.constant 0 : i32
    return %arg0, %arg1 : i32, i32
  }
}

</mosaic_0001>

<llo_original>
// kernel: tpu_custom_call.1
$region0: #{tpu_custom_call.1}
  #allocation0 [shape = 'u32[]', space=smem, size = 0x4, offset = 0x4, fixed_abs, tag = 'smem constant byte address 0x4 - core index']
  #allocation1 [shape = 'u32[144,128]{1,0:T(1,128)}', space=vmem, size = 0x12000, scoped, tag = 'internal scratch']
  #allocation2 [shape = 'f32[8,128]{1,0:T(8,128)}', space=vmem, size = 0x1000, scoped, tag = 'scratch operand']
  %s0 = inlined_call_operand.hbm [shape: f32[8,128], index: 0, kind: input, shape index: {}]
  %s1 = inlined_call_operand.hbm [shape: f32[128,128], index: 1, kind: input, shape index: {}]
  %s2 = inlined_call_operand.vmem [shape: f32[1,128], index: 2, kind: input, shape index: {}]
  %s3 = inlined_call_operand.hbm [shape: f32[8,128], index: 3, kind: output, shape index: {}]
  %s4 = sld [smem:[#allocation0]]
  $region38: #{tpu_custom_call.1} parent=0
    _
  %s6 = ssub.s32 1, %s4
  %s7 = scalar_select 0, %s6, %s4
  $region1: #{tpu_custom_call.1} parent=0
    #allocation3 [shape = 'u8[4096]{0}', space=vmem, size = 0x1000, scoped, tag = 'input window, operand 0, single buffered']
    #allocation4 [shape = 's32[1]{0}', space=sflag, size = 0x4, scoped, tag = 'scoped memory for tpu_custom_call.1']
    #allocation5 [shape = 's32[1]{0}', space=sflag, size = 0x4, scoped, tag = 'scoped memory for tpu_custom_call.1']
    #allocation6 [shape = 'u8[65536]{0}', space=vmem, size = 0x10000, scoped, tag = 'input window, operand 1, single buffered']
    #allocation7 [shape = 's32[1]{0}', space=sflag, size = 0x4, scoped, tag = 'scoped memory for tpu_custom_call.1']
    #allocation8 [shape = 'u8[4096]{0}', space=vmem, size = 0x1000, scoped, tag = 'output window, operand 0, single buffered']
    %8 = vsyncpa [#allocation4], 0
    %9 = vsyncpa [#allocation7], 0
    %10 = vsyncpa [#allocation5], 0
    // Predicated region
    $region2: #{tpu_custom_call.1} parent=1 // pred_check
      _
    $region3: #{tpu_custom_call.1} parent=1 // pred_check_branch
      %12 = sbr.rel (0) target = $region5
    $region4: #{tpu_custom_call.1} parent=1 // pred_region
      %s14 = ssub.s32 128, 128
      %15 = vsyncadd [#allocation4], %s14
      %s17 = sshll.u32 [#allocation3], 4
      %s18 = int_to_ptr.vmem [resolvable:$true] %s17
      %20 = dma.hbm_to_vmem [thread:$0]  %s0, 128, %s18, [#allocation4]
    $region5: #{tpu_custom_call.1} parent=1 // pred_fallthru
      _
    // Predicated region
    $region6: #{tpu_custom_call.1} parent=1 // pred_check
      _
    $region7: #{tpu_custom_call.1} parent=1 // pred_check_branch
      %22 = sbr.rel (0) target = $region9
    $region8: #{tpu_custom_call.1} parent=1 // pred_region
      %s24 = ssub.s32 2048, 2048
      %25 = vsyncadd [#allocation7], %s24
      %s26 = sshll.u32 [#allocation6], 4
      %s27 = int_to_ptr.vmem [resolvable:$true] %s26
      %32 = dma.hbm_to_vmem [thread:$0]  %s1, 2048, %s27, [#allocation7], 128, 128, 8
    $region9: #{tpu_custom_call.1} parent=1 // pred_fallthru
      _
    // Predicated region
    $region10: #{tpu_custom_call.1} parent=1 // pred_check
      _
    $region11: #{tpu_custom_call.1} parent=1 // pred_check_branch
      %34 = sbr.rel (0) target = $region13
    $region12: #{tpu_custom_call.1} parent=1 // pred_region
      _
    $region13: #{tpu_custom_call.1} parent=1 // pred_fallthru
      _
    // Predicated region
    $region14: #{tpu_custom_call.1} parent=1 // pred_check
      _
    $region15: #{tpu_custom_call.1} parent=1 // pred_check_branch
      %36 = sbr.rel (0) target = $region17
    $region16: #{tpu_custom_call.1} parent=1 // pred_region
      %37 = dma.done [#allocation4], 128
    $region17: #{tpu_custom_call.1} parent=1 // pred_fallthru
      _
    // Predicated region
    $region18: #{tpu_custom_call.1} parent=1 // pred_check
      _
    $region19: #{tpu_custom_call.1} parent=1 // pred_check_branch
      %39 = sbr.rel (0) target = $region21
    $region20: #{tpu_custom_call.1} parent=1 // pred_region
      %40 = dma.done [#allocation7], 2048
    $region21: #{tpu_custom_call.1} parent=1 // pred_fallthru
      _
    %p41 = scmp.eq.s32.totalorder 0, 0
    // Predicated region
    $region22: #{tpu_custom_call.1} parent=1 // pred_check
      %p42 = pneg %p41
    $region23: #{tpu_custom_call.1} parent=1 // pred_check_branch
      %44 = sbr.rel (%p42) target = $region25
    $region24: #{tpu_custom_call.1} parent=1 // pred_region
      %v45 = vld [vmem:[%s2] sm:$0x1]
      %v47 = vlaneseq
      %v48 = vshrl.u32 %v47, 7
      %v49 = vsub.s32 0, %v48
      %v50 = vrot.slane %v45, %v49
      %v52 = vadd.f32 %v50, 0.0
      %53 = vst [vmem:[#allocation2] sm:$0xff] %v52
    $region25: #{tpu_custom_call.1} parent=1 // pred_fallthru
      _
    %v54 = vld [vmem:[#allocation2] sm:$0xff]
    %v55 = vld [vmem:[#allocation3] sm:$0xff]
    %v56 = vld [vmem:[#allocation6] sm:$0xff]
    %v57 = vld [vmem:[#allocation6 + $0x8] sm:$0xff]
    %v58 = vld [vmem:[#allocation6 + $0x10] sm:$0xff]
    %v59 = vld [vmem:[#allocation6 + $0x18] sm:$0xff]
    %v60 = vld [vmem:[#allocation6 + $0x20] sm:$0xff]
    %v61 = vld [vmem:[#allocation6 + $0x28] sm:$0xff]
    %v62 = vld [vmem:[#allocation6 + $0x30] sm:$0xff]
    %v63 = vld [vmem:[#allocation6 + $0x38] sm:$0xff]
    %v64 = vld [vmem:[#allocation6 + $0x40] sm:$0xff]
    %v65 = vld [vmem:[#allocation6 + $0x48] sm:$0xff]
    %v66 = vld [vmem:[#allocation6 + $0x50] sm:$0xff]
    %v67 = vld [vmem:[#allocation6 + $0x58] sm:$0xff]
    %v68 = vld [vmem:[#allocation6 + $0x60] sm:$0xff]
    %v69 = vld [vmem:[#allocation6 + $0x68] sm:$0xff]
    %v70 = vld [vmem:[#allocation6 + $0x70] sm:$0xff]
    %v71 = vld [vmem:[#allocation6 + $0x78] sm:$0xff]
    %72 = vmatprep.subr.mxu0 0.0
    %73 = vmatpush1.msra.mxu0 %v56
    %74 = vmatprep.subr.mxu0 0.0
    %75 = vmatpush1.msra.mxu0 %v57
    %76 = vmatprep.subr.mxu0 0.0
    %77 = vmatpush1.msra.mxu0 %v58
    %78 = vmatprep.subr.mxu0 0.0
    %79 = vmatpush1.msra.mxu0 %v59
    %80 = vmatprep.subr.mxu0 0.0
    %81 = vmatpush1.msra.mxu0 %v60
    %82 = vmatprep.subr.mxu0 0.0
    %83 = vmatpush1.msra.mxu0 %v61
    %84 = vmatprep.subr.mxu0 0.0
    %85 = vmatpush1.msra.mxu0 %v62
    %86 = vmatprep.subr.mxu0 0.0
    %87 = vmatpush1.msra.mxu0 %v63
    %88 = vmatprep.subr.mxu0 0.0
    %89 = vmatpush1.msra.mxu0 %v64
    %90 = vmatprep.subr.mxu0 0.0
    %91 = vmatpush1.msra.mxu0 %v65
    %92 = vmatprep.subr.mxu0 0.0
    %93 = vmatpush1.msra.mxu0 %v66
    %94 = vmatprep.subr.mxu0 0.0
    %95 = vmatpush1.msra.mxu0 %v67
    %96 = vmatprep.subr.mxu0 0.0
    %97 = vmatpush1.msra.mxu0 %v68
    %98 = vmatprep.subr.mxu0 0.0
    %99 = vmatpush1.msra.mxu0 %v69
    %100 = vmatprep.subr.mxu0 0.0
    %101 = vmatpush1.msra.mxu0 %v70
    %102 = vmatprep.subr.mxu0 0.0
    %103 = vmatpush1.msra.mxu0 %v71
    %104 = vmatprep.subr.mxu0 0.0
    %105 = vmatpush1.msra.mxu0 0.0
    %106 = vmatprep.subr.mxu0 0.0
    %107 = vmatpush1.msra.mxu0 0.0
    %108 = vmatprep.subr.mxu0 0.0
    %109 = vmatpush1.msra.mxu0 0.0
    %110 = vmatprep.subr.mxu0 0.0
    %111 = vmatpush1.msra.mxu0 0.0
    %112 = vmatprep.subr.mxu0 0.0
    %113 = vmatpush1.msra.mxu0 0.0
    %114 = vmatprep.subr.mxu0 0.0
    %115 = vmatpush1.msra.mxu0 0.0
    %116 = vmatprep.subr.mxu0 0.0
    %117 = vmatpush1.msra.mxu0 0.0
    %118 = vmatprep.subr.mxu0 0.0
    %119 = vmatpush1.msra.mxu0 0.0
    %120 = vmatprep.subr.mxu0 0.0
    %121 = vmatpush1.msra.mxu0 0.0
    %122 = vmatprep.subr.mxu0 0.0
    %123 = vmatpush1.msra.mxu0 0.0
    %124 = vmatprep.subr.mxu0 0.0
    %125 = vmatpush1.msra.mxu0 0.0
    %126 = vmatprep.subr.mxu0 0.0
    %127 = vmatpush1.msra.mxu0 0.0
    %128 = vmatprep.subr.mxu0 0.0
    %129 = vmatpush1.msra.mxu0 0.0
    %130 = vmatprep.subr.mxu0 0.0
    %131 = vmatpush1.msra.mxu0 0.0
    %132 = vmatprep.subr.mxu0 0.0
    %133 = vmatpush1.msra.mxu0 0.0
    %134 = vmatprep.subr.mxu0 0.0
    %135 = vmatpush1.msra.mxu0 0.0
    %136 = vmatprep.mubr.f32.mxu0 0.0
    %137 = vmatmul.mubr.f32.gmra.mrb[0].mxu0 %v55
    %v138 = vpop.f32.mrb[0].mxu0
    %v139 = vadd.f32 0.0, %v138
    %v140 = vpop.f32.mrb[0].mxu0
    %141 = vdwg.mxu0
    %v142 = vadd.f32 %v54, %v139
    %143 = vst [vmem:[#allocation2] sm:$0xff] %v142
    // Predicated region
    $region26: #{tpu_custom_call.1} parent=1 // pred_check
      %p144 = pneg %p41
    $region27: #{tpu_custom_call.1} parent=1 // pred_check_branch
      %146 = sbr.rel (%p144) target = $region29
    $region28: #{tpu_custom_call.1} parent=1 // pred_region
      %v147 = vld [vmem:[#allocation2] sm:$0xff]
      %148 = vst [vmem:[#allocation8] sm:$0xff] %v147
    $region29: #{tpu_custom_call.1} parent=1 // pred_fallthru
      _
    // Predicated region
    $region30: #{tpu_custom_call.1} parent=1 // pred_check
      _
    $region31: #{tpu_custom_call.1} parent=1 // pred_check_branch
      %150 = sbr.rel (0) target = $region33
    $region32: #{tpu_custom_call.1} parent=1 // pred_region
      %s152 = ssub.s32 128, 128
      %153 = vsyncadd [#allocation5], %s152
      %s155 = sshll.u32 [#allocation8], 4
      %s156 = int_to_ptr.vmem [resolvable:$true] %s155
      %158 = dma.vmem_to_hbm [thread:$0]  %s156, 128, %s3, [#allocation5]
    $region33: #{tpu_custom_call.1} parent=1 // pred_fallthru
      _
    // Predicated region
    $region34: #{tpu_custom_call.1} parent=1 // pred_check
      _
    $region35: #{tpu_custom_call.1} parent=1 // pred_check_branch
      %160 = sbr.rel (0) target = $region37
    $region36: #{tpu_custom_call.1} parent=1 // pred_region
      %161 = dma.done [#allocation5], 128
    $region37: #{tpu_custom_call.1} parent=1 // pred_fallthru
      _
    %162 = vsyncpa [#allocation4], 1
    %163 = vsyncpa [#allocation7], 1
    %164 = vsyncpa [#allocation5], 1

</llo_original>
